<compile_context>
chip_gen: v7x
topology: tpu7x:2x2x1
jax: 0.10.0
libtpu: 0.0.40
codegen_flags: <defaults>
</compile_context>

<pallas_src>
import jax
import jax.numpy as jnp
from jax import lax
from jax.experimental import pallas as pl
from jax.experimental.pallas import tpu as pltpu

TILE_B_MAX = 512  # batch columns per grid step (multiple of 128, lane-dense)


def _policy_kernel(x_ref, w1_ref, b1_ref, w2_ref, b2_ref, out_ref):
    # x_ref : (8, TILE_B)   rows 0-3 = state features^T, rows 4-7 = zeros
    # w1_ref: (128, 8)      fc1 weight [out, in] zero-padded in=4 -> 8
    # b1_ref: (128, 1)
    # w2_ref: (8, 128)      fc2 weight [out, in] zero-padded out=2 -> 8
    # b2_ref: (8, 1)
    # out_ref: (2, TILE_B)  per-column action probabilities
    x = x_ref[...]

    # fc1 + ReLU: (128, 8) @ (8, TILE_B) on the MXU, bias/ReLU on the VPU.
    h = jnp.dot(w1_ref[...], x, preferred_element_type=jnp.float32)
    h = jnp.maximum(h + b1_ref[...], 0.0)                     # (128, TILE_B)

    # fc2: (8, 128) @ (128, TILE_B) on the MXU (rows 2-7 are zero padding).
    logits = jnp.dot(w2_ref[...], h, preferred_element_type=jnp.float32)
    logits = logits + b2_ref[...]                             # (8, TILE_B)

    # Numerically stable 2-way softmax on the two real logit rows.
    l0 = logits[0:1, :]
    l1 = logits[1:2, :]
    m = jnp.maximum(l0, l1)
    e0 = jnp.exp(l0 - m)                                      # EUP
    e1 = jnp.exp(l1 - m)
    s = e0 + e1
    inv = pl.reciprocal(s, approx=True)                       # EUP slot
    inv = inv * (2.0 - s * inv)                               # one Newton step

    # Two lane-dense row stores (last dim = TILE_B, a multiple of 128).
    out_ref[0:1, :] = e0 * inv
    out_ref[1:2, :] = e1 * inv


def make_params(key):
    """Torch nn.Linear-style init, pre-materialized in kernel layouts."""
    k1, k2, k3, k4 = jax.random.split(key, 4)
    bound1 = 1.0 / jnp.sqrt(4.0)
    bound2 = 1.0 / jnp.sqrt(128.0)
    fc1_w = jax.random.uniform(k1, (128, 4), jnp.float32, -bound1, bound1)  # [out, in]
    fc1_b = jax.random.uniform(k2, (128,), jnp.float32, -bound1, bound1)
    fc2_w = jax.random.uniform(k3, (2, 128), jnp.float32, -bound2, bound2)  # [out, in]
    fc2_b = jax.random.uniform(k4, (2,), jnp.float32, -bound2, bound2)

    w1p = jnp.zeros((128, 8), jnp.float32).at[:, :4].set(fc1_w)   # K padded 4 -> 8
    b1 = fc1_b.reshape(128, 1)
    w2p = jnp.zeros((8, 128), jnp.float32).at[:2, :].set(fc2_w)   # M padded 2 -> 8
    b2p = jnp.zeros((8, 1), jnp.float32).at[:2, 0].set(fc2_b)
    return w1p, b1, w2p, b2p


def _tile_for(batch):
    """Largest 128-aligned tile <= TILE_B_MAX that covers small batches in one step."""
    b128 = ((batch + 127) // 128) * 128
    return min(TILE_B_MAX, b128)


@jax.jit
def policy_forward_batched(xs, w1p, b1, w2p, b2p):
    """xs: (B, 4) f32 CartPole states -> (B, 2) per-row action probabilities."""
    B = xs.shape[0]
    tile = _tile_for(B)
    n_steps = pl.cdiv(B, tile)
    Bp = n_steps * tile

    # Kernel-layout input: (8, Bp), rows 0-3 hold the transposed states, rows
    # 4-7 (and the batch tail) are zeros.  Production callers that already
    # keep rollouts in this layout can feed it directly and skip this copy.
    xs_t = jnp.zeros((8, Bp), jnp.float32).at[:4, :B].set(xs.T.astype(jnp.float32))

    probs_t = pl.pallas_call(
        _policy_kernel,
        out_shape=jax.ShapeDtypeStruct((2, Bp), jnp.float32),
        grid=(n_steps,),
        in_specs=[
            pl.BlockSpec((8, tile), lambda i: (0, i)),    # states (gridded over B)
            pl.BlockSpec((128, 8), lambda i: (0, 0)),     # w1 (VMEM-resident)
            pl.BlockSpec((128, 1), lambda i: (0, 0)),     # b1
            pl.BlockSpec((8, 128), lambda i: (0, 0)),     # w2
            pl.BlockSpec((8, 1), lambda i: (0, 0)),       # b2
        ],
        out_specs=pl.BlockSpec((2, tile), lambda i: (0, i)),
        compiler_params=pltpu.CompilerParams(dimension_semantics=("parallel",)),
    )(xs_t, w1p, b1, w2p, b2p)

    return probs_t[:, :B].T                                # (B, 2)


def policy_forward(x, w1p, b1, w2p, b2p):
    """Single CartPole state (4,) -> (2,), matching Policy.forward (softmax dim=0)."""
    return policy_forward_batched(x.reshape(1, 4), w1p, b1, w2p, b2p)[0]


def _reference_batched(xs, w1p, b1, w2p, b2p):
    hp = jax.lax.Precision.HIGHEST
    h = jnp.maximum(jnp.dot(xs, w1p[:, :4].T, precision=hp) + b1[:, 0], 0.0)
    logits = jnp.dot(h, w2p[:2, :].T, precision=hp) + b2p[:2, 0]
    return jax.nn.softmax(logits, axis=-1)


if __name__ == "__main__":
    key = jax.random.PRNGKey(0)
    kx, kp = jax.random.split(key)

    B = 16  # small rollout batch of CartPole states
    xs = jax.random.normal(kx, (B, 4), jnp.float32)
    w1p, b1, w2p, b2p = make_params(kp)

    probs = jax.block_until_ready(policy_forward_batched(xs, w1p, b1, w2p, b2p))
    ref = _reference_batched(xs, w1p, b1, w2p, b2p)

    assert probs.shape == (B, 2)
    assert jnp.allclose(jnp.sum(probs, axis=-1), 1.0, atol=1e-5)
    assert jnp.allclose(probs, ref, atol=2e-3), (probs, ref)

    # Single-state path (original module semantics: (4,) -> softmax over dim 0).
    p_single = jax.block_until_ready(policy_forward(xs[0], w1p, b1, w2p, b2p))
    assert p_single.shape == (2,)
    assert jnp.allclose(p_single, ref[0], atol=2e-3), (p_single, ref[0])

    # TODO(synk): train_net (Adam update, discounted-return loss) and Categorical
    # sampling are outside the forward pass and are not implemented here.
    print("KERNEL_OK")
</pallas_src>

<mosaic_0001>
module attributes {stable_mosaic.version = 11 : i64} {
  func.func @_policy_kernel(%arg0: i32, %arg1: memref<8x128xf32, #tpu.memory_space<vmem>>, %arg2: memref<128x8xf32, #tpu.memory_space<vmem>>, %arg3: memref<128x1xf32, #tpu.memory_space<vmem>>, %arg4: memref<8x128xf32, #tpu.memory_space<vmem>>, %arg5: memref<8x1xf32, #tpu.memory_space<vmem>>, %arg6: memref<2x128xf32, #tpu.memory_space<vmem>>) attributes {dimension_semantics = [#tpu.dimension_semantics<parallel>], iteration_bounds = array<i64: 1>, scalar_prefetch = 0 : i64, scratch_operands = 0 : i64, tpu.core_type = #tpu.core_type<tc>, window_params = [{transform_indices = @transform_0, window_bounds = array<i64: 8, 128>}, {pipeline_mode = #tpu.pipeline_mode<synchronous>, transform_indices = @transform_1, window_bounds = array<i64: 128, 8>}, {pipeline_mode = #tpu.pipeline_mode<synchronous>, transform_indices = @transform_2, window_bounds = array<i64: 128, 1>}, {pipeline_mode = #tpu.pipeline_mode<synchronous>, transform_indices = @transform_3, window_bounds = array<i64: 8, 128>}, {pipeline_mode = #tpu.pipeline_mode<synchronous>, transform_indices = @transform_4, window_bounds = array<i64: 8, 1>}, {transform_indices = @transform_5, window_bounds = array<i64: 2, 128>}]} {
    %c0 = arith.constant 0 : index
    %c0_0 = arith.constant 0 : index
    %0 = vector.load %arg1[%c0, %c0_0] : memref<8x128xf32, #tpu.memory_space<vmem>>, vector<8x128xf32>
    %c0_1 = arith.constant 0 : index
    %c0_2 = arith.constant 0 : index
    %1 = vector.load %arg2[%c0_1, %c0_2] : memref<128x8xf32, #tpu.memory_space<vmem>>, vector<128x8xf32>
    %cst = arith.constant dense<0.000000e+00> : vector<128x128xf32>
    %2 = tpu.matmul %1, %0, %cst {dimension_numbers = #tpu.dot_dimension_numbers<[1], [0], [0], [1], [0, 0, 1, 1], [], []>} : vector<128x8xf32>, vector<8x128xf32>, vector<128x128xf32> -> vector<128x128xf32>
    %c0_3 = arith.constant 0 : index
    %c0_4 = arith.constant 0 : index
    %3 = vector.load %arg3[%c0_3, %c0_4] : memref<128x1xf32, #tpu.memory_space<vmem>>, vector<128x1xf32>
    %4 = vector.broadcast %3 : vector<128x1xf32> to vector<128x128xf32>
    %5 = arith.addf %2, %4 : vector<128x128xf32>
    %cst_5 = arith.constant 0.000000e+00 : f32
    %6 = vector.broadcast %cst_5 : f32 to vector<128x128xf32>
    %7 = arith.maximumf %5, %6 : vector<128x128xf32>
    %c0_6 = arith.constant 0 : index
    %c0_7 = arith.constant 0 : index
    %8 = vector.load %arg4[%c0_6, %c0_7] : memref<8x128xf32, #tpu.memory_space<vmem>>, vector<8x128xf32>
    %cst_8 = arith.constant dense<0.000000e+00> : vector<8x128xf32>
    %9 = tpu.matmul %8, %7, %cst_8 {dimension_numbers = #tpu.dot_dimension_numbers<[1], [0], [0], [1], [0, 0, 1, 1], [], []>} : vector<8x128xf32>, vector<128x128xf32>, vector<8x128xf32> -> vector<8x128xf32>
    %c0_9 = arith.constant 0 : index
    %c0_10 = arith.constant 0 : index
    %10 = vector.load %arg5[%c0_9, %c0_10] : memref<8x1xf32, #tpu.memory_space<vmem>>, vector<8x1xf32>
    %11 = vector.broadcast %10 : vector<8x1xf32> to vector<8x128xf32>
    %12 = arith.addf %9, %11 : vector<8x128xf32>
    %13 = vector.extract_strided_slice %12 {offsets = [0, 0], sizes = [1, 128], strides = [1, 1]} : vector<8x128xf32> to vector<1x128xf32>
    %14 = vector.extract_strided_slice %12 {offsets = [1, 0], sizes = [1, 128], strides = [1, 1]} : vector<8x128xf32> to vector<1x128xf32>
    %15 = arith.maximumf %13, %14 : vector<1x128xf32>
    %16 = arith.subf %13, %15 : vector<1x128xf32>
    %17 = math.exp %16 : vector<1x128xf32>
    %18 = arith.subf %14, %15 : vector<1x128xf32>
    %19 = math.exp %18 : vector<1x128xf32>
    %20 = arith.addf %17, %19 : vector<1x128xf32>
    %21 = tpu.reciprocal %20 {approx = true} : vector<1x128xf32> -> vector<1x128xf32>
    %22 = arith.mulf %20, %21 : vector<1x128xf32>
    %cst_11 = arith.constant 2.000000e+00 : f32
    %23 = vector.broadcast %cst_11 : f32 to vector<1x128xf32>
    %24 = arith.subf %23, %22 : vector<1x128xf32>
    %25 = arith.mulf %21, %24 : vector<1x128xf32>
    %26 = arith.mulf %17, %25 : vector<1x128xf32>
    %c0_12 = arith.constant 0 : index
    %c0_13 = arith.constant 0 : index
    %27 = vector.load %arg6[%c0_12, %c0_13] : memref<2x128xf32, #tpu.memory_space<vmem>>, vector<1x128xf32>
    tpu.vector_store %arg6[%c0_12, %c0_13], %26 {strides = array<i32>} : memref<2x128xf32, #tpu.memory_space<vmem>>, vector<1x128xf32>,
    %28 = arith.mulf %19, %25 : vector<1x128xf32>
    %c1 = arith.constant 1 : index
    %c0_14 = arith.constant 0 : index
    %29 = vector.load %arg6[%c1, %c0_14] : memref<2x128xf32, #tpu.memory_space<vmem>>, vector<1x128xf32>
    tpu.vector_store %arg6[%c1, %c0_14], %28 {strides = array<i32>} : memref<2x128xf32, #tpu.memory_space<vmem>>, vector<1x128xf32>,
    return
  }
  func.func @transform_0(%arg0: i32) -> (i32, i32) {
    %c0_i32 = arith.constant 0 : i32
    %c0_i32_0 = arith.constant 0 : i32
    return %c0_i32, %arg0 : i32, i32
  }
  func.func @transform_1(%arg0: i32) -> (i32, i32) {
    %c0_i32 = arith.constant 0 : i32
    %c0_i32_0 = arith.constant 0 : i32
    %c0_i32_1 = arith.constant 0 : i32
    return %c0_i32, %c0_i32_0 : i32, i32
  }
  func.func @transform_2(%arg0: i32) -> (i32, i32) {
    %c0_i32 = arith.constant 0 : i32
    %c0_i32_0 = arith.constant 0 : i32
    %c0_i32_1 = arith.constant 0 : i32
    return %c0_i32, %c0_i32_0 : i32, i32
  }
  func.func @transform_3(%arg0: i32) -> (i32, i32) {
    %c0_i32 = arith.constant 0 : i32
    %c0_i32_0 = arith.constant 0 : i32
    %c0_i32_1 = arith.constant 0 : i32
    return %c0_i32, %c0_i32_0 : i32, i32
  }
  func.func @transform_4(%arg0: i32) -> (i32, i32) {
    %c0_i32 = arith.constant 0 : i32
    %c0_i32_0 = arith.constant 0 : i32
    %c0_i32_1 = arith.constant 0 : i32
    return %c0_i32, %c0_i32_0 : i32, i32
  }
  func.func @transform_5(%arg0: i32) -> (i32, i32) {
    %c0_i32 = arith.constant 0 : i32
    %c0_i32_0 = arith.constant 0 : i32
    return %c0_i32, %arg0 : i32, i32
  }
}

</mosaic_0001>

<llo_original>
// kernel: policy_forward_batched.1
$region0: #{policy_forward_batched.1}
  #allocation0 [shape = 'u32[]', space=smem, size = 0x4, offset = 0x4, fixed_abs, tag = 'smem constant byte address 0x4 - core index']
  #allocation1 [shape = 'u32[144,128]{1,0:T(1,128)}', space=vmem, size = 0x12000, scoped, tag = 'internal scratch']
  %s0 = inlined_call_operand.vmem [shape: f32[8,128], index: 0, kind: input, shape index: {}]
  %s1 = inlined_call_operand.vmem [shape: f32[128,8], index: 1, kind: input, shape index: {}]
  %s2 = inlined_call_operand.vmem [shape: f32[128,1], index: 2, kind: input, shape index: {}]
  %s3 = inlined_call_operand.vmem [shape: f32[8,128], index: 3, kind: input, shape index: {}]
  %s4 = inlined_call_operand.vmem [shape: f32[8,1], index: 4, kind: input, shape index: {}]
  %s5 = inlined_call_operand.vmem [shape: f32[2,128], index: 5, kind: output, shape index: {}]
  %s6 = sld [smem:[#allocation0]]
  $region30: #{policy_forward_batched.1} parent=0
    _
  %s8 = ssub.s32 1, %s6
  %s9 = scalar_select 0, %s8, %s6
  // Predicated region
  $region2: #{policy_forward_batched.1} parent=0 // pred_check
    _
  $region3: #{policy_forward_batched.1} parent=0 // pred_check_branch
    %11 = sbr.rel (0) target = $region5
  $region4: #{policy_forward_batched.1} parent=0 // pred_region
    _
  $region5: #{policy_forward_batched.1} parent=0 // pred_fallthru
    _
  // Predicated region
  $region6: #{policy_forward_batched.1} parent=0 // pred_check
    _
  $region7: #{policy_forward_batched.1} parent=0 // pred_check_branch
    %13 = sbr.rel (0) target = $region9
  $region8: #{policy_forward_batched.1} parent=0 // pred_region
    _
  $region9: #{policy_forward_batched.1} parent=0 // pred_fallthru
    _
  // Predicated region
  $region10: #{policy_forward_batched.1} parent=0 // pred_check
    _
  $region11: #{policy_forward_batched.1} parent=0 // pred_check_branch
    %15 = sbr.rel (0) target = $region13
  $region12: #{policy_forward_batched.1} parent=0 // pred_region
    _
  $region13: #{policy_forward_batched.1} parent=0 // pred_fallthru
    _
  // Predicated region
  $region14: #{policy_forward_batched.1} parent=0 // pred_check
    _
  $region15: #{policy_forward_batched.1} parent=0 // pred_check_branch
    %17 = sbr.rel (0) target = $region17
  $region16: #{policy_forward_batched.1} parent=0 // pred_region
    _
  $region17: #{policy_forward_batched.1} parent=0 // pred_fallthru
    _
  // Predicated region
  $region18: #{policy_forward_batched.1} parent=0 // pred_check
    _
  $region19: #{policy_forward_batched.1} parent=0 // pred_check_branch
    %19 = sbr.rel (0) target = $region21
  $region20: #{policy_forward_batched.1} parent=0 // pred_region
    _
  $region21: #{policy_forward_batched.1} parent=0 // pred_fallthru
    _
  %v20 = vld [vmem:[%s0] sm:$0xff]
  %v21 = vld [vmem:[%s1] sm:$0xff]
  %v22 = vld [vmem:[%s1 + $0x8] sm:$0xff]
  %v23 = vld [vmem:[%s1 + $0x10] sm:$0xff]
  %v24 = vld [vmem:[%s1 + $0x18] sm:$0xff]
  %v25 = vld [vmem:[%s1 + $0x20] sm:$0xff]
  %v26 = vld [vmem:[%s1 + $0x28] sm:$0xff]
  %v27 = vld [vmem:[%s1 + $0x30] sm:$0xff]
  %v28 = vld [vmem:[%s1 + $0x38] sm:$0xff]
  %v29 = vld [vmem:[%s1 + $0x40] sm:$0xff]
  %v30 = vld [vmem:[%s1 + $0x48] sm:$0xff]
  %v31 = vld [vmem:[%s1 + $0x50] sm:$0xff]
  %v32 = vld [vmem:[%s1 + $0x58] sm:$0xff]
  %v33 = vld [vmem:[%s1 + $0x60] sm:$0xff]
  %v34 = vld [vmem:[%s1 + $0x68] sm:$0xff]
  %v35 = vld [vmem:[%s1 + $0x70] sm:$0xff]
  %v36 = vld [vmem:[%s1 + $0x78] sm:$0xff]
  %v37 = vld [vmem:[%s2] sm:$0xff]
  %v38 = vld [vmem:[%s2 + $0x8] sm:$0xff]
  %v39 = vld [vmem:[%s2 + $0x10] sm:$0xff]
  %v40 = vld [vmem:[%s2 + $0x18] sm:$0xff]
  %v41 = vld [vmem:[%s2 + $0x20] sm:$0xff]
  %v42 = vld [vmem:[%s2 + $0x28] sm:$0xff]
  %v43 = vld [vmem:[%s2 + $0x30] sm:$0xff]
  %v44 = vld [vmem:[%s2 + $0x38] sm:$0xff]
  %v45 = vld [vmem:[%s2 + $0x40] sm:$0xff]
  %v46 = vld [vmem:[%s2 + $0x48] sm:$0xff]
  %v47 = vld [vmem:[%s2 + $0x50] sm:$0xff]
  %v48 = vld [vmem:[%s2 + $0x58] sm:$0xff]
  %v49 = vld [vmem:[%s2 + $0x60] sm:$0xff]
  %v50 = vld [vmem:[%s2 + $0x68] sm:$0xff]
  %v51 = vld [vmem:[%s2 + $0x70] sm:$0xff]
  %v52 = vld [vmem:[%s2 + $0x78] sm:$0xff]
  %54 = vset.pattern.permute.xlu0 0
  %55 = vperm.xlu0 %54, %v37
  %v56 = vpop.permute.xlu0 %55
  %59 = vset.pattern.permute.xlu0 0
  %60 = vperm.xlu0 %59, %v38
  %v61 = vpop.permute.xlu0 %60
  %64 = vset.pattern.permute.xlu0 0
  %65 = vperm.xlu0 %64, %v39
  %v66 = vpop.permute.xlu0 %65
  %69 = vset.pattern.permute.xlu0 0
  %70 = vperm.xlu0 %69, %v40
  %v71 = vpop.permute.xlu0 %70
  %74 = vset.pattern.permute.xlu0 0
  %75 = vperm.xlu0 %74, %v41
  %v76 = vpop.permute.xlu0 %75
  %79 = vset.pattern.permute.xlu0 0
  %80 = vperm.xlu0 %79, %v42
  %v81 = vpop.permute.xlu0 %80
  %84 = vset.pattern.permute.xlu0 0
  %85 = vperm.xlu0 %84, %v43
  %v86 = vpop.permute.xlu0 %85
  %89 = vset.pattern.permute.xlu0 0
  %90 = vperm.xlu0 %89, %v44
  %v91 = vpop.permute.xlu0 %90
  %94 = vset.pattern.permute.xlu0 0
  %95 = vperm.xlu0 %94, %v45
  %v96 = vpop.permute.xlu0 %95
  %99 = vset.pattern.permute.xlu0 0
  %100 = vperm.xlu0 %99, %v46
  %v101 = vpop.permute.xlu0 %100
  %104 = vset.pattern.permute.xlu0 0
  %105 = vperm.xlu0 %104, %v47
  %v106 = vpop.permute.xlu0 %105
  %109 = vset.pattern.permute.xlu0 0
  %110 = vperm.xlu0 %109, %v48
  %v111 = vpop.permute.xlu0 %110
  %114 = vset.pattern.permute.xlu0 0
  %115 = vperm.xlu0 %114, %v49
  %v116 = vpop.permute.xlu0 %115
  %119 = vset.pattern.permute.xlu0 0
  %120 = vperm.xlu0 %119, %v50
  %v121 = vpop.permute.xlu0 %120
  %124 = vset.pattern.permute.xlu0 0
  %125 = vperm.xlu0 %124, %v51
  %v126 = vpop.permute.xlu0 %125
  %129 = vset.pattern.permute.xlu0 0
  %130 = vperm.xlu0 %129, %v52
  %v131 = vpop.permute.xlu0 %130
  %vm133 = vcmask 64512
  %v135 = vsel %vm133, %v21, 0
  %v138 = vsel %vm133, %v22, 0
  %v141 = vsel %vm133, %v23, 0
  %v144 = vsel %vm133, %v24, 0
  %v147 = vsel %vm133, %v25, 0
  %v150 = vsel %vm133, %v26, 0
  %v153 = vsel %vm133, %v27, 0
  %v156 = vsel %vm133, %v28, 0
  %v159 = vsel %vm133, %v29, 0
  %v162 = vsel %vm133, %v30, 0
  %v165 = vsel %vm133, %v31, 0
  %v168 = vsel %vm133, %v32, 0
  %v171 = vsel %vm133, %v33, 0
  %v174 = vsel %vm133, %v34, 0
  %v177 = vsel %vm133, %v35, 0
  %v180 = vsel %vm133, %v36, 0
  %182 = vmatprep.subr.mxu0 0.0
  %183 = vmatpush1.msra.mxu0 %v20
  %184 = vmatprep.subr.mxu0 0.0
  %185 = vmatpush1.msra.mxu0 0.0
  %186 = vmatprep.subr.mxu0 0.0
  %187 = vmatpush1.msra.mxu0 0.0
  %188 = vmatprep.subr.mxu0 0.0
  %189 = vmatpush1.msra.mxu0 0.0
  %190 = vmatprep.subr.mxu0 0.0
  %191 = vmatpush1.msra.mxu0 0.0
  %192 = vmatprep.subr.mxu0 0.0
  %193 = vmatpush1.msra.mxu0 0.0
  %194 = vmatprep.subr.mxu0 0.0
  %195 = vmatpush1.msra.mxu0 0.0
  %196 = vmatprep.subr.mxu0 0.0
  %197 = vmatpush1.msra.mxu0 0.0
  %198 = vmatprep.subr.mxu0 0.0
  %199 = vmatpush1.msra.mxu0 0.0
  %200 = vmatprep.subr.mxu0 0.0
  %201 = vmatpush1.msra.mxu0 0.0
  %202 = vmatprep.subr.mxu0 0.0
  %203 = vmatpush1.msra.mxu0 0.0
  %204 = vmatprep.subr.mxu0 0.0
  %205 = vmatpush1.msra.mxu0 0.0
  %206 = vmatprep.subr.mxu0 0.0
  %207 = vmatpush1.msra.mxu0 0.0
  %208 = vmatprep.subr.mxu0 0.0
  %209 = vmatpush1.msra.mxu0 0.0
  %210 = vmatprep.subr.mxu0 0.0
  %211 = vmatpush1.msra.mxu0 0.0
  %212 = vmatprep.subr.mxu0 0.0
  %213 = vmatpush1.msra.mxu0 0.0
  %214 = vmatprep.subr.mxu0 0.0
  %215 = vmatpush1.msra.mxu0 0.0
  %216 = vmatprep.subr.mxu0 0.0
  %217 = vmatpush1.msra.mxu0 0.0
  %218 = vmatprep.subr.mxu0 0.0
  %219 = vmatpush1.msra.mxu0 0.0
  %220 = vmatprep.subr.mxu0 0.0
  %221 = vmatpush1.msra.mxu0 0.0
  %222 = vmatprep.subr.mxu0 0.0
  %223 = vmatpush1.msra.mxu0 0.0
  %224 = vmatprep.subr.mxu0 0.0
  %225 = vmatpush1.msra.mxu0 0.0
  %226 = vmatprep.subr.mxu0 0.0
  %227 = vmatpush1.msra.mxu0 0.0
  %228 = vmatprep.subr.mxu0 0.0
  %229 = vmatpush1.msra.mxu0 0.0
  %230 = vmatprep.subr.mxu0 0.0
  %231 = vmatpush1.msra.mxu0 0.0
  %232 = vmatprep.subr.mxu0 0.0
  %233 = vmatpush1.msra.mxu0 0.0
  %234 = vmatprep.subr.mxu0 0.0
  %235 = vmatpush1.msra.mxu0 0.0
  %236 = vmatprep.subr.mxu0 0.0
  %237 = vmatpush1.msra.mxu0 0.0
  %238 = vmatprep.subr.mxu0 0.0
  %239 = vmatpush1.msra.mxu0 0.0
  %240 = vmatprep.subr.mxu0 0.0
  %241 = vmatpush1.msra.mxu0 0.0
  %242 = vmatprep.subr.mxu0 0.0
  %243 = vmatpush1.msra.mxu0 0.0
  %244 = vmatprep.subr.mxu0 0.0
  %245 = vmatpush1.msra.mxu0 0.0
  %246 = vmatprep.mubr.f32.mxu0 0.0
  %247 = vmatmul.mubr.f32.gmra.mrb[0].mxu0 %v135
  %v248 = vpop.f32.mrb[0].mxu0
  %v249 = vadd.f32 %v56, %v248
  %v250 = vpop.f32.mrb[0].mxu0
  %251 = vmatprep.mubr.f32.mxu0 0.0
  %252 = vmatmul.mubr.f32.gmra.mrb[0].mxu0 %v138
  %v253 = vpop.f32.mrb[0].mxu0
  %v254 = vadd.f32 %v61, %v253
  %v255 = vpop.f32.mrb[0].mxu0
  %256 = vmatprep.mubr.f32.mxu0 0.0
  %257 = vmatmul.mubr.f32.gmra.mrb[0].mxu0 %v141
  %v258 = vpop.f32.mrb[0].mxu0
  %v259 = vadd.f32 %v66, %v258
  %v260 = vpop.f32.mrb[0].mxu0
  %261 = vmatprep.mubr.f32.mxu0 0.0
  %262 = vmatmul.mubr.f32.gmra.mrb[0].mxu0 %v144
  %v263 = vpop.f32.mrb[0].mxu0
  %v264 = vadd.f32 %v71, %v263
  %v265 = vpop.f32.mrb[0].mxu0
  %266 = vmatprep.mubr.f32.mxu0 0.0
  %267 = vmatmul.mubr.f32.gmra.mrb[0].mxu0 %v147
  %v268 = vpop.f32.mrb[0].mxu0
  %v269 = vadd.f32 %v76, %v268
  %v270 = vpop.f32.mrb[0].mxu0
  %271 = vmatprep.mubr.f32.mxu0 0.0
  %272 = vmatmul.mubr.f32.gmra.mrb[0].mxu0 %v150
  %v273 = vpop.f32.mrb[0].mxu0
  %v274 = vadd.f32 %v81, %v273
  %v275 = vpop.f32.mrb[0].mxu0
  %276 = vmatprep.mubr.f32.mxu0 0.0
  %277 = vmatmul.mubr.f32.gmra.mrb[0].mxu0 %v153
  %v278 = vpop.f32.mrb[0].mxu0
  %v279 = vadd.f32 %v86, %v278
  %v280 = vpop.f32.mrb[0].mxu0
  %281 = vmatprep.mubr.f32.mxu0 0.0
  %282 = vmatmul.mubr.f32.gmra.mrb[0].mxu0 %v156
  %v283 = vpop.f32.mrb[0].mxu0
  %v284 = vadd.f32 %v91, %v283
  %v285 = vpop.f32.mrb[0].mxu0
  %286 = vmatprep.mubr.f32.mxu0 0.0
  %287 = vmatmul.mubr.f32.gmra.mrb[0].mxu0 %v159
  %v288 = vpop.f32.mrb[0].mxu0
  %v289 = vadd.f32 %v96, %v288
  %v290 = vpop.f32.mrb[0].mxu0
  %291 = vmatprep.mubr.f32.mxu0 0.0
  %292 = vmatmul.mubr.f32.gmra.mrb[0].mxu0 %v162
  %v293 = vpop.f32.mrb[0].mxu0
  %v294 = vadd.f32 %v101, %v293
  %v295 = vpop.f32.mrb[0].mxu0
  %296 = vmatprep.mubr.f32.mxu0 0.0
  %297 = vmatmul.mubr.f32.gmra.mrb[0].mxu0 %v165
  %v298 = vpop.f32.mrb[0].mxu0
  %v299 = vadd.f32 %v106, %v298
  %v300 = vpop.f32.mrb[0].mxu0
  %301 = vmatprep.mubr.f32.mxu0 0.0
  %302 = vmatmul.mubr.f32.gmra.mrb[0].mxu0 %v168
  %v303 = vpop.f32.mrb[0].mxu0
  %v304 = vadd.f32 %v111, %v303
  %v305 = vpop.f32.mrb[0].mxu0
  %306 = vmatprep.mubr.f32.mxu0 0.0
  %307 = vmatmul.mubr.f32.gmra.mrb[0].mxu0 %v171
  %v308 = vpop.f32.mrb[0].mxu0
  %v309 = vadd.f32 %v116, %v308
  %v310 = vpop.f32.mrb[0].mxu0
  %311 = vmatprep.mubr.f32.mxu0 0.0
  %312 = vmatmul.mubr.f32.gmra.mrb[0].mxu0 %v174
  %v313 = vpop.f32.mrb[0].mxu0
  %v314 = vadd.f32 %v121, %v313
  %v315 = vpop.f32.mrb[0].mxu0
  %316 = vmatprep.mubr.f32.mxu0 0.0
  %317 = vmatmul.mubr.f32.gmra.mrb[0].mxu0 %v177
  %v318 = vpop.f32.mrb[0].mxu0
  %v319 = vadd.f32 %v126, %v318
  %v320 = vpop.f32.mrb[0].mxu0
  %321 = vmatprep.mubr.f32.mxu0 0.0
  %322 = vmatmul.mubr.f32.gmra.mrb[0].mxu0 %v180
  %v323 = vpop.f32.mrb[0].mxu0
  %v324 = vadd.f32 %v131, %v323
  %v325 = vpop.f32.mrb[0].mxu0
  %326 = vdwg.mxu0
  %v327 = vmax.f32 %v249, 0.0
  %v328 = vmax.f32 %v254, 0.0
  %v329 = vmax.f32 %v259, 0.0
  %v330 = vmax.f32 %v264, 0.0
  %v331 = vmax.f32 %v269, 0.0
  %v332 = vmax.f32 %v274, 0.0
  %v333 = vmax.f32 %v279, 0.0
  %v334 = vmax.f32 %v284, 0.0
  %v335 = vmax.f32 %v289, 0.0
  %v336 = vmax.f32 %v294, 0.0
  %v337 = vmax.f32 %v299, 0.0
  %v338 = vmax.f32 %v304, 0.0
  %v339 = vmax.f32 %v309, 0.0
  %v340 = vmax.f32 %v314, 0.0
  %v341 = vmax.f32 %v319, 0.0
  %v342 = vmax.f32 %v324, 0.0
  %v343 = vld [vmem:[%s3] sm:$0xff]
  %v344 = vld [vmem:[%s4] sm:$0xff]
  %346 = vset.pattern.permute.xlu0 0
  %347 = vperm.xlu0 %346, %v344
  %v348 = vpop.permute.xlu0 %347
  %350 = vmatprep.subr.mxu0 0.0
  %351 = vmatpush1.msra.mxu0 %v327
  %352 = vmatprep.subr.mxu0 0.0
  %353 = vmatpush1.msra.mxu0 %v328
  %354 = vmatprep.subr.mxu0 0.0
  %355 = vmatpush1.msra.mxu0 %v329
  %356 = vmatprep.subr.mxu0 0.0
  %357 = vmatpush1.msra.mxu0 %v330
  %358 = vmatprep.subr.mxu0 0.0
  %359 = vmatpush1.msra.mxu0 %v331
  %360 = vmatprep.subr.mxu0 0.0
  %361 = vmatpush1.msra.mxu0 %v332
  %362 = vmatprep.subr.mxu0 0.0
  %363 = vmatpush1.msra.mxu0 %v333
  %364 = vmatprep.subr.mxu0 0.0
  %365 = vmatpush1.msra.mxu0 %v334
  %366 = vmatprep.subr.mxu0 0.0
  %367 = vmatpush1.msra.mxu0 %v335
  %368 = vmatprep.subr.mxu0 0.0
  %369 = vmatpush1.msra.mxu0 %v336
  %370 = vmatprep.subr.mxu0 0.0
  %371 = vmatpush1.msra.mxu0 %v337
  %372 = vmatprep.subr.mxu0 0.0
  %373 = vmatpush1.msra.mxu0 %v338
  %374 = vmatprep.subr.mxu0 0.0
  %375 = vmatpush1.msra.mxu0 %v339
  %376 = vmatprep.subr.mxu0 0.0
  %377 = vmatpush1.msra.mxu0 %v340
  %378 = vmatprep.subr.mxu0 0.0
  %379 = vmatpush1.msra.mxu0 %v341
  %380 = vmatprep.subr.mxu0 0.0
  %381 = vmatpush1.msra.mxu0 %v342
  %382 = vmatprep.subr.mxu0 0.0
  %383 = vmatpush1.msra.mxu0 0.0
  %384 = vmatprep.subr.mxu0 0.0
  %385 = vmatpush1.msra.mxu0 0.0
  %386 = vmatprep.subr.mxu0 0.0
  %387 = vmatpush1.msra.mxu0 0.0
  %388 = vmatprep.subr.mxu0 0.0
  %389 = vmatpush1.msra.mxu0 0.0
  %390 = vmatprep.subr.mxu0 0.0
  %391 = vmatpush1.msra.mxu0 0.0
  %392 = vmatprep.subr.mxu0 0.0
  %393 = vmatpush1.msra.mxu0 0.0
  %394 = vmatprep.subr.mxu0 0.0
  %395 = vmatpush1.msra.mxu0 0.0
  %396 = vmatprep.subr.mxu0 0.0
  %397 = vmatpush1.msra.mxu0 0.0
  %398 = vmatprep.subr.mxu0 0.0
  %399 = vmatpush1.msra.mxu0 0.0
  %400 = vmatprep.subr.mxu0 0.0
  %401 = vmatpush1.msra.mxu0 0.0
  %402 = vmatprep.subr.mxu0 0.0
  %403 = vmatpush1.msra.mxu0 0.0
  %404 = vmatprep.subr.mxu0 0.0
  %405 = vmatpush1.msra.mxu0 0.0
  %406 = vmatprep.subr.mxu0 0.0
  %407 = vmatpush1.msra.mxu0 0.0
  %408 = vmatprep.subr.mxu0 0.0
  %409 = vmatpush1.msra.mxu0 0.0
  %410 = vmatprep.subr.mxu0 0.0
  %411 = vmatpush1.msra.mxu0 0.0
  %412 = vmatprep.subr.mxu0 0.0
  %413 = vmatpush1.msra.mxu0 0.0
  %414 = vmatprep.mubr.f32.mxu0 0.0
  %415 = vmatmul.mubr.f32.gmra.mrb[0].mxu0 %v343
  %v416 = vpop.f32.mrb[0].mxu0
  %v417 = vadd.f32 %v348, %v416
  %v418 = vpop.f32.mrb[0].mxu0
  %419 = vdwg.mxu0
  %v421 = vrot.slane %v417, 1
  %v423 = vmax.f32 %v417, %v421
  %v424 = vsub.f32 %v417, %v423
  %v425 = vmul.f32 %v424, 1.442695
  %v426 = vpow.pop %v425
  %v428 = vrot.slane %v423, 7
  %v430 = vsub.f32 %v417, %v428
  %v431 = vmul.f32 %v430, 1.442695
  %v432 = vpow.pop %v431
  %v434 = vrot.slane %v432, 1
  %v436 = vadd.f32 %v426, %v434
  %v437 = vrcp.pop %v436
  %v438 = vmul.f32 %v436, %v437
  %v439 = vsub.f32 2.0, %v438
  %v440 = vmul.f32 %v437, %v439
  %v441 = vmul.f32 %v426, %v440
  %442 = vst [vmem:[%s5] sm:$0x1] %v441
  %v444 = vrot.slane %v440, 7
  %v446 = vmul.f32 %v432, %v444
  %447 = vst [vmem:[%s5] sm:$0x2] %v446
  // Predicated region
  $region22: #{policy_forward_batched.1} parent=0 // pred_check
    _
  $region23: #{policy_forward_batched.1} parent=0 // pred_check_branch
    %449 = sbr.rel (0) target = $region25
  $region24: #{policy_forward_batched.1} parent=0 // pred_region
    _
  $region25: #{policy_forward_batched.1} parent=0 // pred_fallthru
    _
  // Predicated region
  $region26: #{policy_forward_batched.1} parent=0 // pred_check
    _
  $region27: #{policy_forward_batched.1} parent=0 // pred_check_branch
    %451 = sbr.rel (0) target = $region29
  $region28: #{policy_forward_batched.1} parent=0 // pred_region
    _
  $region29: #{policy_forward_batched.1} parent=0 // pred_fallthru
    _

</llo_original>
